<compile_context>
chip_gen: v5e
topology: v5e:2x2
jax: 0.10.0
libtpu: 0.0.40
codegen_flags: <defaults>
</compile_context>

<pallas_src>
import jax
import jax.numpy as jnp
from jax.experimental import pallas as pl
from jax.experimental.pallas import tpu as pltpu


def _diffusion_kernel(w_ref,                       # VMEM: (BC, BC) f32 block-diag channel mix
                      a_ref, s_ref, bias_ref,      # VMEM: (BC, 1) f32 per-row coefficients
                      x_ref, eps_ref,              # VMEM: (BC, T) f32 inputs
                      noisy_ref, pred_ref):        # VMEM: (BC, T) f32 outputs
    x = x_ref[...]                                 # (BC, T)
    eps = eps_ref[...]                             # (BC, T)

    # make_noisy: x * sqrt_alpha_bar + eps * sqrt(1 - alpha_bar)
    # (BC, 1) coefficient vectors broadcast over the lane axis (pure VPU).
    noisy = x * a_ref[...] + eps * s_ref[...]
    noisy_ref[...] = noisy

    # Synthetic model: block-diagonal (BC, BC) x (BC, T) channel mix on the MXU,
    # plus per-(batch, channel) time-embedding bias broadcast over lanes.
    pred_ref[...] = (jnp.dot(w_ref[...], noisy,
                             preferred_element_type=jnp.float32)
                     + bias_ref[...])


def _pick_hw_tile(hw, bc, *, bytes_per_elem=4, min_step_bytes=256 * 1024):
    """Choose the lane-axis tile.

    Largest multiple-of-128 divisor of `hw` up to 8192 lanes; only split into
    multiple grid steps when each step still moves a substantial slab
    (>= min_step_bytes per streamed array), otherwise process the full extent
    in a single step (best on single-TensorCore v5e/v6e and for tiny images).
    """
    if hw % 128 != 0:
        return hw                                   # full extent, single block
    tile = 128
    for cand in range(min(8192, hw), 127, -128):
        if hw % cand == 0:
            tile = cand
            break
    if hw // tile >= 2 and bc * tile * bytes_per_elem >= min_step_bytes:
        return tile
    return hw


def diffusion_forward(x_zeros, t, epsilon, sqrt_alpha_bars,
                      sqrt_one_minus_alpha_bars, w_mix, time_emb):
    """x_zeros: (B, C, H, W) f32; t: (B,) int32. Returns (noisy, epsilon, pred_eps) NCHW."""
    B, C, H, W = x_zeros.shape
    HW = H * W
    BC = B * C

    # Cheap host-side gathers (matches Diffusion.extract) folded into per-row vectors.
    coef_a = sqrt_alpha_bars[t].astype(jnp.float32)                 # (B,)
    coef_b = sqrt_one_minus_alpha_bars[t].astype(jnp.float32)       # (B,)
    a_rows = jnp.repeat(coef_a, C).reshape(BC, 1)                   # row b*C+c -> a[b]
    s_rows = jnp.repeat(coef_b, C).reshape(BC, 1)                   # row b*C+c -> s[b]
    bias_rows = time_emb[t].astype(jnp.float32).reshape(BC, 1)      # row b*C+c -> emb[t[b], c]

    # Block-diagonal channel-mix matrix: pred[b*C+o] = sum_c w_mix[o,c] * noisy[b*C+c].
    w_bd = jnp.kron(jnp.eye(B, dtype=jnp.float32),
                    w_mix.astype(jnp.float32))                      # (BC, BC)

    x_flat = x_zeros.reshape(BC, HW).astype(jnp.float32)
    eps_flat = epsilon.reshape(BC, HW).astype(jnp.float32)

    tile = _pick_hw_tile(HW, BC)
    grid = (HW // tile,)

    noisy, pred = pl.pallas_call(
        _diffusion_kernel,
        grid=grid,
        in_specs=[
            pl.BlockSpec((BC, BC), lambda j: (0, 0)),               # w_bd (resident)
            pl.BlockSpec((BC, 1), lambda j: (0, 0)),                # a_rows (resident)
            pl.BlockSpec((BC, 1), lambda j: (0, 0)),                # s_rows (resident)
            pl.BlockSpec((BC, 1), lambda j: (0, 0)),                # bias_rows (resident)
            pl.BlockSpec((BC, tile), lambda j: (0, j)),             # x
            pl.BlockSpec((BC, tile), lambda j: (0, j)),             # eps
        ],
        out_specs=[
            pl.BlockSpec((BC, tile), lambda j: (0, j)),             # noisy
            pl.BlockSpec((BC, tile), lambda j: (0, j)),             # pred_eps
        ],
        out_shape=[
            jax.ShapeDtypeStruct((BC, HW), jnp.float32),
            jax.ShapeDtypeStruct((BC, HW), jnp.float32),
        ],
        compiler_params=pltpu.CompilerParams(
            dimension_semantics=("parallel",)),
    )(w_bd, a_rows, s_rows, bias_rows, x_flat, eps_flat)

    return noisy.reshape(B, C, H, W), epsilon, pred.reshape(B, C, H, W)


if __name__ == "__main__":
    # Small shapes consistent with the module.
    B, C, H, W = 2, 4, 16, 16
    n_times = 300
    beta_1, beta_T = 1e-4, 0.02

    # Diffusion schedule (mirrors Diffusion.__init__).
    betas = jnp.linspace(beta_1, beta_T, n_times, dtype=jnp.float32)
    alphas = 1.0 - betas
    alpha_bars = jnp.cumprod(alphas)
    sqrt_alpha_bars = jnp.sqrt(alpha_bars)
    sqrt_one_minus_alpha_bars = jnp.sqrt(1.0 - alpha_bars)

    key = jax.random.PRNGKey(0)
    k_x, k_t, k_eps, k_w, k_emb = jax.random.split(key, 5)

    x_zeros = jax.random.uniform(k_x, (B, C, H, W), dtype=jnp.float32)
    t = jax.random.randint(k_t, (B,), 0, n_times, dtype=jnp.int32)
    epsilon = jax.random.normal(k_eps, (B, C, H, W), dtype=jnp.float32)

    # Deterministic synthetic model params (1x1 channel-mix conv + time-embedding bias).
    # TODO(synk): the original module's `model` is an arbitrary injected nn.Module (e.g. a UNet);
    # it is replaced here by this fixed channel-mix + time-bias denoiser.
    w_mix = jax.random.normal(k_w, (C, C), dtype=jnp.float32) * 0.1
    time_emb = jax.random.normal(k_emb, (n_times, C), dtype=jnp.float32) * 0.1

    noisy, eps_out, pred = diffusion_forward(
        x_zeros, t, epsilon, sqrt_alpha_bars, sqrt_one_minus_alpha_bars,
        w_mix, time_emb)
    jax.block_until_ready((noisy, eps_out, pred))

    # Pure-JAX reference check.
    a_ref = sqrt_alpha_bars[t][:, None, None, None]
    s_ref = sqrt_one_minus_alpha_bars[t][:, None, None, None]
    noisy_ref = x_zeros * a_ref + epsilon * s_ref
    pred_ref = (jnp.einsum("oc,bchw->bohw", w_mix, noisy_ref)
                + time_emb[t][:, :, None, None])

    assert jnp.allclose(noisy, noisy_ref, atol=1e-5), "noisy mismatch"
    assert jnp.allclose(eps_out, epsilon), "epsilon mismatch"
    assert jnp.allclose(pred, pred_ref, atol=1e-4), "pred mismatch"

    print("KERNEL_OK")
</pallas_src>

<mosaic_0001>
module attributes {stable_mosaic.version = 11 : i64} {
  func.func @_diffusion_kernel(%arg0: i32, %arg1: memref<8x8xf32, #tpu.memory_space<vmem>>, %arg2: memref<8x1xf32, #tpu.memory_space<vmem>>, %arg3: memref<8x1xf32, #tpu.memory_space<vmem>>, %arg4: memref<8x1xf32, #tpu.memory_space<vmem>>, %arg5: memref<8x256xf32, #tpu.memory_space<vmem>>, %arg6: memref<8x256xf32, #tpu.memory_space<vmem>>, %arg7: memref<8x256xf32, #tpu.memory_space<vmem>>, %arg8: memref<8x256xf32, #tpu.memory_space<vmem>>) attributes {dimension_semantics = [#tpu.dimension_semantics<parallel>], iteration_bounds = array<i64: 1>, scalar_prefetch = 0 : i64, scratch_operands = 0 : i64, tpu.core_type = #tpu.core_type<tc>, window_params = [{pipeline_mode = #tpu.pipeline_mode<synchronous>, transform_indices = @transform_0, window_bounds = array<i64: 8, 8>}, {pipeline_mode = #tpu.pipeline_mode<synchronous>, transform_indices = @transform_1, window_bounds = array<i64: 8, 1>}, {pipeline_mode = #tpu.pipeline_mode<synchronous>, transform_indices = @transform_2, window_bounds = array<i64: 8, 1>}, {pipeline_mode = #tpu.pipeline_mode<synchronous>, transform_indices = @transform_3, window_bounds = array<i64: 8, 1>}, {transform_indices = @transform_4, window_bounds = array<i64: 8, 256>}, {transform_indices = @transform_5, window_bounds = array<i64: 8, 256>}, {transform_indices = @transform_6, window_bounds = array<i64: 8, 256>}, {transform_indices = @transform_7, window_bounds = array<i64: 8, 256>}]} {
    %c0 = arith.constant 0 : index
    %c0_0 = arith.constant 0 : index
    %0 = vector.load %arg5[%c0, %c0_0] : memref<8x256xf32, #tpu.memory_space<vmem>>, vector<8x256xf32>
    %c0_1 = arith.constant 0 : index
    %c0_2 = arith.constant 0 : index
    %1 = vector.load %arg6[%c0_1, %c0_2] : memref<8x256xf32, #tpu.memory_space<vmem>>, vector<8x256xf32>
    %c0_3 = arith.constant 0 : index
    %c0_4 = arith.constant 0 : index
    %2 = vector.load %arg2[%c0_3, %c0_4] : memref<8x1xf32, #tpu.memory_space<vmem>>, vector<8x1xf32>
    %3 = vector.broadcast %2 : vector<8x1xf32> to vector<8x256xf32>
    %4 = arith.mulf %0, %3 : vector<8x256xf32>
    %c0_5 = arith.constant 0 : index
    %c0_6 = arith.constant 0 : index
    %5 = vector.load %arg3[%c0_5, %c0_6] : memref<8x1xf32, #tpu.memory_space<vmem>>, vector<8x1xf32>
    %6 = vector.broadcast %5 : vector<8x1xf32> to vector<8x256xf32>
    %7 = arith.mulf %1, %6 : vector<8x256xf32>
    %8 = arith.addf %4, %7 : vector<8x256xf32>
    %c0_7 = arith.constant 0 : index
    %c0_8 = arith.constant 0 : index
    %9 = vector.load %arg7[%c0_7, %c0_8] : memref<8x256xf32, #tpu.memory_space<vmem>>, vector<8x256xf32>
    tpu.vector_store %arg7[%c0_7, %c0_8], %8 {strides = array<i32>} : memref<8x256xf32, #tpu.memory_space<vmem>>, vector<8x256xf32>,
    %c0_9 = arith.constant 0 : index
    %c0_10 = arith.constant 0 : index
    %10 = vector.load %arg1[%c0_9, %c0_10] : memref<8x8xf32, #tpu.memory_space<vmem>>, vector<8x8xf32>
    %cst = arith.constant dense<0.000000e+00> : vector<8x256xf32>
    %11 = tpu.matmul %10, %8, %cst {dimension_numbers = #tpu.dot_dimension_numbers<[1], [0], [0], [1], [0, 0, 1, 1], [], []>} : vector<8x8xf32>, vector<8x256xf32>, vector<8x256xf32> -> vector<8x256xf32>
    %c0_11 = arith.constant 0 : index
    %c0_12 = arith.constant 0 : index
    %12 = vector.load %arg4[%c0_11, %c0_12] : memref<8x1xf32, #tpu.memory_space<vmem>>, vector<8x1xf32>
    %13 = vector.broadcast %12 : vector<8x1xf32> to vector<8x256xf32>
    %14 = arith.addf %11, %13 : vector<8x256xf32>
    %c0_13 = arith.constant 0 : index
    %c0_14 = arith.constant 0 : index
    %15 = vector.load %arg8[%c0_13, %c0_14] : memref<8x256xf32, #tpu.memory_space<vmem>>, vector<8x256xf32>
    tpu.vector_store %arg8[%c0_13, %c0_14], %14 {strides = array<i32>} : memref<8x256xf32, #tpu.memory_space<vmem>>, vector<8x256xf32>,
    return
  }
  func.func @transform_0(%arg0: i32) -> (i32, i32) {
    %c0_i32 = arith.constant 0 : i32
    %c0_i32_0 = arith.constant 0 : i32
    %c0_i32_1 = arith.constant 0 : i32
    return %c0_i32, %c0_i32_0 : i32, i32
  }
  func.func @transform_1(%arg0: i32) -> (i32, i32) {
    %c0_i32 = arith.constant 0 : i32
    %c0_i32_0 = arith.constant 0 : i32
    %c0_i32_1 = arith.constant 0 : i32
    return %c0_i32, %c0_i32_0 : i32, i32
  }
  func.func @transform_2(%arg0: i32) -> (i32, i32) {
    %c0_i32 = arith.constant 0 : i32
    %c0_i32_0 = arith.constant 0 : i32
    %c0_i32_1 = arith.constant 0 : i32
    return %c0_i32, %c0_i32_0 : i32, i32
  }
  func.func @transform_3(%arg0: i32) -> (i32, i32) {
    %c0_i32 = arith.constant 0 : i32
    %c0_i32_0 = arith.constant 0 : i32
    %c0_i32_1 = arith.constant 0 : i32
    return %c0_i32, %c0_i32_0 : i32, i32
  }
  func.func @transform_4(%arg0: i32) -> (i32, i32) {
    %c0_i32 = arith.constant 0 : i32
    %c0_i32_0 = arith.constant 0 : i32
    return %c0_i32, %arg0 : i32, i32
  }
  func.func @transform_5(%arg0: i32) -> (i32, i32) {
    %c0_i32 = arith.constant 0 : i32
    %c0_i32_0 = arith.constant 0 : i32
    return %c0_i32, %arg0 : i32, i32
  }
  func.func @transform_6(%arg0: i32) -> (i32, i32) {
    %c0_i32 = arith.constant 0 : i32
    %c0_i32_0 = arith.constant 0 : i32
    return %c0_i32, %arg0 : i32, i32
  }
  func.func @transform_7(%arg0: i32) -> (i32, i32) {
    %c0_i32 = arith.constant 0 : i32
    %c0_i32_0 = arith.constant 0 : i32
    return %c0_i32, %arg0 : i32, i32
  }
}

</mosaic_0001>

<llo_original>
// kernel: tpu_custom_call.1
$region0: #{tpu_custom_call.1}
  #allocation0 [shape = 'u32[]', space=smem, size = 0x4, offset = 0x4, fixed_abs, tag = 'smem constant byte address 0x4 - core index']
  #allocation1 [shape = 'u32[72,128]{1,0:T(1,128)}', space=vmem, size = 0x9000, scoped, tag = 'internal scratch']
  %s0 = inlined_call_operand.vmem [shape: f32[8,8], index: 0, kind: input, shape index: {}]
  %s1 = inlined_call_operand.vmem [shape: f32[8,1], index: 1, kind: input, shape index: {}]
  %s2 = inlined_call_operand.vmem [shape: f32[8,1], index: 2, kind: input, shape index: {}]
  %s3 = inlined_call_operand.vmem [shape: f32[8,1], index: 3, kind: input, shape index: {}]
  %s4 = inlined_call_operand.vmem [shape: f32[8,256], index: 4, kind: input, shape index: {}]
  %s5 = inlined_call_operand.hbm [shape: f32[8,256], index: 5, kind: input, shape index: {}]
  %s6 = inlined_call_operand.hbm [shape: f32[8,256], index: 6, kind: output, shape index: {0}]
  %s7 = inlined_call_operand.hbm [shape: f32[8,256], index: 7, kind: output, shape index: {1}]
  %8 = xla_tuple %s6, %s7
  %s9 = sld [smem:[#allocation0]]
  $region46: #{tpu_custom_call.1} parent=0
    _
  %s11 = ssub.s32 1, %s9
  %s12 = scalar_select 0, %s11, %s9
  $region1: #{tpu_custom_call.1} parent=0
    #allocation2 [shape = 'u8[8192]{0}', space=vmem, size = 0x2000, scoped, tag = 'input window, operand 5, single buffered']
    #allocation3 [shape = 's32[1]{0}', space=sflag, size = 0x4, scoped, tag = 'scoped memory for tpu_custom_call.1']
    #allocation4 [shape = 's32[1]{0}', space=sflag, size = 0x4, scoped, tag = 'scoped memory for tpu_custom_call.1']
    #allocation5 [shape = 'u8[8192]{0}', space=vmem, size = 0x2000, scoped, tag = 'output window, operand 0, single buffered']
    #allocation6 [shape = 'u8[8192]{0}', space=vmem, size = 0x2000, scoped, tag = 'output window, operand 1, single buffered']
    #allocation7 [shape = 's32[1]{0}', space=sflag, size = 0x4, scoped, tag = 'scoped memory for tpu_custom_call.1']
    %13 = vsyncpa [#allocation3], 0
    %14 = vsyncpa [#allocation4], 0
    %15 = vsyncpa [#allocation7], 0
    // Predicated region
    $region2: #{tpu_custom_call.1} parent=1 // pred_check
      _
    $region3: #{tpu_custom_call.1} parent=1 // pred_check_branch
      %17 = sbr.rel (0) target = $region5
    $region4: #{tpu_custom_call.1} parent=1 // pred_region
      _
    $region5: #{tpu_custom_call.1} parent=1 // pred_fallthru
      _
    // Predicated region
    $region6: #{tpu_custom_call.1} parent=1 // pred_check
      _
    $region7: #{tpu_custom_call.1} parent=1 // pred_check_branch
      %19 = sbr.rel (0) target = $region9
    $region8: #{tpu_custom_call.1} parent=1 // pred_region
      _
    $region9: #{tpu_custom_call.1} parent=1 // pred_fallthru
      _
    // Predicated region
    $region10: #{tpu_custom_call.1} parent=1 // pred_check
      _
    $region11: #{tpu_custom_call.1} parent=1 // pred_check_branch
      %21 = sbr.rel (0) target = $region13
    $region12: #{tpu_custom_call.1} parent=1 // pred_region
      _
    $region13: #{tpu_custom_call.1} parent=1 // pred_fallthru
      _
    // Predicated region
    $region14: #{tpu_custom_call.1} parent=1 // pred_check
      _
    $region15: #{tpu_custom_call.1} parent=1 // pred_check_branch
      %23 = sbr.rel (0) target = $region17
    $region16: #{tpu_custom_call.1} parent=1 // pred_region
      _
    $region17: #{tpu_custom_call.1} parent=1 // pred_fallthru
      _
    // Predicated region
    $region18: #{tpu_custom_call.1} parent=1 // pred_check
      _
    $region19: #{tpu_custom_call.1} parent=1 // pred_check_branch
      %25 = sbr.rel (0) target = $region21
    $region20: #{tpu_custom_call.1} parent=1 // pred_region
      _
    $region21: #{tpu_custom_call.1} parent=1 // pred_fallthru
      _
    // Predicated region
    $region22: #{tpu_custom_call.1} parent=1 // pred_check
      _
    $region23: #{tpu_custom_call.1} parent=1 // pred_check_branch
      %27 = sbr.rel (0) target = $region25
    $region24: #{tpu_custom_call.1} parent=1 // pred_region
      %29 = vsyncadd [#allocation3], 0
      %s31 = sshll.u32 %s5, 4
      %s32 = int_to_ptr.hbm [resolvable:$true] %s31
      %s33 = sshll.u32 [#allocation2], 4
      %s34 = int_to_ptr.vmem [resolvable:$true] %s33
      %36 = dma.hbm_to_vmem [thread:$0]  %s32, 256, %s34, [#allocation3]
    $region25: #{tpu_custom_call.1} parent=1 // pred_fallthru
      _
    // Predicated region
    $region26: #{tpu_custom_call.1} parent=1 // pred_check
      _
    $region27: #{tpu_custom_call.1} parent=1 // pred_check_branch
      %38 = sbr.rel (0) target = $region29
    $region28: #{tpu_custom_call.1} parent=1 // pred_region
      %40 = dma.done [#allocation3], 256
    $region29: #{tpu_custom_call.1} parent=1 // pred_fallthru
      _
    %v41 = vld [vmem:[%s4] sm:$0xff]
    %v42 = vld [vmem:[%s4 + $0x8] sm:$0xff]
    %v43 = vld [vmem:[#allocation2] sm:$0xff]
    %v44 = vld [vmem:[#allocation2 + $0x8] sm:$0xff]
    %v45 = vld [vmem:[%s1] sm:$0xff]
    %47 = vset.pattern.permute.xlu0 0
    %48 = vperm.xlu0 %47, %v45
    %v49 = vpop.permute.xlu0 %48
    %v51 = vmul.f32 %v41, %v49
    %v52 = vmul.f32 %v42, %v49
    %v53 = vld [vmem:[%s2] sm:$0xff]
    %55 = vset.pattern.permute.xlu0 0
    %56 = vperm.xlu0 %55, %v53
    %v57 = vpop.permute.xlu0 %56
    %v59 = vmul.f32 %v43, %v57
    %v60 = vmul.f32 %v44, %v57
    %v61 = vadd.f32 %v51, %v59
    %v62 = vadd.f32 %v52, %v60
    %63 = vst [vmem:[#allocation5] sm:$0xff] %v61
    %64 = vst [vmem:[#allocation5 + $0x8] sm:$0xff] %v62
    %v65 = vld [vmem:[%s0] sm:$0xff]
    %v66 = vld [vmem:[%s3] sm:$0xff]
    %68 = vset.pattern.permute.xlu0 0
    %69 = vperm.xlu0 %68, %v66
    %v70 = vpop.permute.xlu0 %69
    %vm72 = vcmask 64512
    %v74 = vsel %vm72, %v65, 0
    %76 = vmatpush.msra.mxu0 0.0
    %77 = vmatpush.msra.mxu0 0.0
    %78 = vmatpush.msra.mxu0 0.0
    %79 = vmatpush.msra.mxu0 0.0
    %80 = vmatpush.msra.mxu0 0.0
    %81 = vmatpush.msra.mxu0 0.0
    %82 = vmatpush.msra.mxu0 0.0
    %83 = vmatpush.msra.mxu0 0.0
    %84 = vmatpush.msra.mxu0 0.0
    %85 = vmatpush.msra.mxu0 0.0
    %86 = vmatpush.msra.mxu0 0.0
    %87 = vmatpush.msra.mxu0 0.0
    %88 = vmatpush.msra.mxu0 0.0
    %89 = vmatpush.msra.mxu0 0.0
    %90 = vmatpush.msra.mxu0 0.0
    %91 = vmatpush.msra.mxu0 %v61
    %92 = vmatmul.f32.gmra.mxu0 %v74
    %v93 = vpop.f32.mrf.mxu0
    %v94 = vadd.f32 %v70, %v93
    %95 = vdwg.mxu0
    %96 = vmatpush.msra.mxu0 0.0
    %97 = vmatpush.msra.mxu0 0.0
    %98 = vmatpush.msra.mxu0 0.0
    %99 = vmatpush.msra.mxu0 0.0
    %100 = vmatpush.msra.mxu0 0.0
    %101 = vmatpush.msra.mxu0 0.0
    %102 = vmatpush.msra.mxu0 0.0
    %103 = vmatpush.msra.mxu0 0.0
    %104 = vmatpush.msra.mxu0 0.0
    %105 = vmatpush.msra.mxu0 0.0
    %106 = vmatpush.msra.mxu0 0.0
    %107 = vmatpush.msra.mxu0 0.0
    %108 = vmatpush.msra.mxu0 0.0
    %109 = vmatpush.msra.mxu0 0.0
    %110 = vmatpush.msra.mxu0 0.0
    %111 = vmatpush.msra.mxu0 %v62
    %112 = vmatmul.f32.gmra.mxu0 %v74
    %v113 = vpop.f32.mrf.mxu0
    %v114 = vadd.f32 %v70, %v113
    %115 = vdwg.mxu0
    %116 = vst [vmem:[#allocation6] sm:$0xff] %v94
    %117 = vst [vmem:[#allocation6 + $0x8] sm:$0xff] %v114
    // Predicated region
    $region30: #{tpu_custom_call.1} parent=1 // pred_check
      _
    $region31: #{tpu_custom_call.1} parent=1 // pred_check_branch
      %119 = sbr.rel (0) target = $region33
    $region32: #{tpu_custom_call.1} parent=1 // pred_region
      %121 = vsyncadd [#allocation4], 0
      %s123 = sshll.u32 [#allocation5], 4
      %s124 = int_to_ptr.vmem [resolvable:$true] %s123
      %s125 = sshll.u32 %s6, 4
      %s126 = int_to_ptr.hbm [resolvable:$true] %s125
      %128 = dma.vmem_to_hbm [thread:$0]  %s124, 256, %s126, [#allocation4]
    $region33: #{tpu_custom_call.1} parent=1 // pred_fallthru
      _
    // Predicated region
    $region34: #{tpu_custom_call.1} parent=1 // pred_check
      _
    $region35: #{tpu_custom_call.1} parent=1 // pred_check_branch
      %130 = sbr.rel (0) target = $region37
    $region36: #{tpu_custom_call.1} parent=1 // pred_region
      %132 = vsyncadd [#allocation7], 0
      %s134 = sshll.u32 [#allocation6], 4
      %s135 = int_to_ptr.vmem [resolvable:$true] %s134
      %s136 = sshll.u32 %s7, 4
      %s137 = int_to_ptr.hbm [resolvable:$true] %s136
      %139 = dma.vmem_to_hbm [thread:$0]  %s135, 256, %s137, [#allocation7]
    $region37: #{tpu_custom_call.1} parent=1 // pred_fallthru
      _
    // Predicated region
    $region38: #{tpu_custom_call.1} parent=1 // pred_check
      _
    $region39: #{tpu_custom_call.1} parent=1 // pred_check_branch
      %141 = sbr.rel (0) target = $region41
    $region40: #{tpu_custom_call.1} parent=1 // pred_region
      %143 = dma.done [#allocation4], 256
    $region41: #{tpu_custom_call.1} parent=1 // pred_fallthru
      _
    // Predicated region
    $region42: #{tpu_custom_call.1} parent=1 // pred_check
      _
    $region43: #{tpu_custom_call.1} parent=1 // pred_check_branch
      %145 = sbr.rel (0) target = $region45
    $region44: #{tpu_custom_call.1} parent=1 // pred_region
      %147 = dma.done [#allocation7], 256
    $region45: #{tpu_custom_call.1} parent=1 // pred_fallthru
      _
    %148 = vsyncpa [#allocation3], 1
    %149 = vsyncpa [#allocation4], 1
    %150 = vsyncpa [#allocation7], 1

</llo_original>
